<compile_context>
chip_gen: v5e
topology: v5e:2x2
jax: 0.10.0
libtpu: 0.0.40
codegen_flags: <defaults>
</compile_context>

<pallas_src>
import functools

import jax
import jax.numpy as jnp
from jax.experimental import pallas as pl
from jax.experimental.pallas import tpu as pltpu

LANE = 128
SUBLANES = 8
MAX_BLOCK_ROWS = 8192     # (8192, 128) f32 block = 4 MiB -> 2 tensors x 2 bufs
                          # = 16 MiB of input buffers; vmem_limit_bytes is set
                          # explicitly so this fits every generation.
STRIP_ROWS = 256          # in-block compute strip (256, 128): keeps live f32
                          # intermediates to ~0.5 MiB regardless of block size.


def _round_up(a, m):
    return (a + m - 1) // m * m


def _ftl_partials_kernel(x_ref, t_ref, out_ref, *, block_rows):
    """Accumulate vreg-shaped partials of [sum(s*t), sum(s), sum(t)].

    out_ref block is (3, 8, 128): row 0 = s*t partials, row 1 = s partials,
    row 2 = t partials.  It stays VMEM-resident across the 'arbitrary' grid
    axis (same block index for every j) and is written back once per parallel
    slice.  Compute is strip-mined so big input blocks do not blow up VMEM.
    """

    @pl.when(pl.program_id(1) == 0)
    def _():
        out_ref[...] = jnp.zeros_like(out_ref)

    def strip_sums(row0, nrows):
        # Cast after the DMA so HBM traffic stays at the inputs' native dtypes.
        x = x_ref[pl.ds(row0, nrows), :].astype(jnp.float32)
        t = t_ref[pl.ds(row0, nrows), :].astype(jnp.float32)
        s = jax.nn.sigmoid(x)      # EUP transcendental; separate issue slot.
        st = s * t
        g = nrows // SUBLANES
        # Reduce only over whole (8, 128) vreg groups -> pure VPU adds in the
        # hot loop; the one-off cross-sublane/lane reduction happens in the
        # wrapper epilogue.
        return (jnp.sum(st.reshape(g, SUBLANES, LANE), axis=0),
                jnp.sum(s.reshape(g, SUBLANES, LANE), axis=0),
                jnp.sum(t.reshape(g, SUBLANES, LANE), axis=0))

    zero = jnp.zeros((SUBLANES, LANE), jnp.float32)
    st_p, s_p, t_p = zero, zero, zero

    full_strips = block_rows // STRIP_ROWS
    tail_rows = block_rows % STRIP_ROWS          # static; multiple of 8

    if full_strips > 0:
        def body(g, carry):
            a, b, c = carry
            row0 = pl.multiple_of(g * STRIP_ROWS, STRIP_ROWS)
            da, db, dc = strip_sums(row0, STRIP_ROWS)
            return a + da, b + db, c + dc
        st_p, s_p, t_p = jax.lax.fori_loop(
            0, full_strips, body, (st_p, s_p, t_p))

    if tail_rows > 0:
        da, db, dc = strip_sums(full_strips * STRIP_ROWS, tail_rows)
        st_p, s_p, t_p = st_p + da, s_p + db, t_p + dc

    out_ref[0] += st_p
    out_ref[1] += s_p
    out_ref[2] += t_p


def _tversky_sums(inputs, targets):
    """Return (sum(s*t), sum(s), sum(t)) as f32 scalars via the Pallas kernel."""
    x = inputs.reshape(-1)
    t = targets.reshape(-1)
    n = x.shape[0]

    rem = n % LANE
    if rem:
        # Only for n % 128 != 0: a sub-row sentinel pad so the flat vector
        # reshapes to (rows, 128).  sigmoid(-1e9) == 0 and target pad == 0, so
        # padded elements contribute exactly nothing to any of the three sums.
        # TODO(synk): a 1-D BlockSpec over the flat array would avoid this copy.
        pad = LANE - rem
        x = jnp.pad(x, (0, pad), constant_values=-1e9)
        t = jnp.pad(t, (0, pad), constant_values=0)

    rows = x.shape[0] // LANE
    x2 = x.reshape(rows, LANE)
    t2 = t.reshape(rows, LANE)

    st = jnp.float32(0.0)
    s_sum = jnp.float32(0.0)
    t_sum = jnp.float32(0.0)
    covered_rows = 0

    if rows >= SUBLANES:
        # Leading "parallel" grid axis: always 2-way for larger inputs so both
        # TensorCores of a v7x chip are used (a no-op on single-TC v5e/v6e).
        num_parallel = 2 if rows >= 1024 else 1
        # Aim for a few sequential steps per core (DMA/compute overlap) while
        # keeping every step's block >= ~1 MiB so the ~0.35 us per-step
        # overhead stays amortized; very large inputs saturate at
        # MAX_BLOCK_ROWS-sized blocks.
        steps_per_core = min(4, max(1, rows // (num_parallel * 2048)))
        num_blocks = max(pl.cdiv(rows, MAX_BLOCK_ROWS),
                         num_parallel * steps_per_core)
        num_blocks = _round_up(num_blocks, num_parallel)
        block_rows = max(SUBLANES,
                         (rows // num_blocks) // SUBLANES * SUBLANES)
        blocks_per_slice = num_blocks // num_parallel
        covered_rows = num_blocks * block_rows
        assert covered_rows <= rows      # grid never reads out of bounds

        in_map = lambda p, j: (p * blocks_per_slice + j, 0)

        in_block_bytes = block_rows * LANE * (
            x2.dtype.itemsize + t2.dtype.itemsize)
        # Double-buffered inputs + strip intermediates + margin; well under
        # v5e/v6e's 128 MiB and v7x's 64 MiB physical VMEM.
        vmem_limit = int(min(2 * in_block_bytes + (16 << 20), 64 << 20))

        n_cov = covered_rows * LANE
        cost = pl.CostEstimate(
            flops=int(6 * n_cov),
            transcendentals=int(n_cov),
            bytes_accessed=int(
                covered_rows * LANE * (x2.dtype.itemsize + t2.dtype.itemsize)
                + num_parallel * 3 * SUBLANES * LANE * 4))

        partials = pl.pallas_call(
            functools.partial(_ftl_partials_kernel, block_rows=block_rows),
            out_shape=jax.ShapeDtypeStruct(
                (3 * num_parallel, SUBLANES, LANE), jnp.float32),
            grid=(num_parallel, blocks_per_slice),
            in_specs=[
                pl.BlockSpec((block_rows, LANE), in_map),
                pl.BlockSpec((block_rows, LANE), in_map),
            ],
            out_specs=pl.BlockSpec((3, SUBLANES, LANE), lambda p, j: (p, 0, 0)),
            compiler_params=pltpu.CompilerParams(
                dimension_semantics=("parallel", "arbitrary"),
                vmem_limit_bytes=vmem_limit),
            cost_estimate=cost,
        )(x2, t2)

        sums = jnp.sum(
            partials.reshape(num_parallel, 3, SUBLANES * LANE), axis=(0, 2))
        st, s_sum, t_sum = sums[0], sums[1], sums[2]

    if covered_rows < rows:
        # Tiny leftover (rows not covered by whole blocks, and/or a sub-8-row
        # input): plain JAX reads only these bytes; no masking in the kernel.
        x_rest = x2[covered_rows:].astype(jnp.float32)
        t_rest = t2[covered_rows:].astype(jnp.float32)
        s_rest = jax.nn.sigmoid(x_rest)
        st = st + jnp.sum(s_rest * t_rest)
        s_sum = s_sum + jnp.sum(s_rest)
        t_sum = t_sum + jnp.sum(t_rest)

    return st, s_sum, t_sum


def focal_tversky_loss(inputs, targets, alpha=1.0, beta=0.3, gamma=2.0,
                       epsilon=1e-6, reduction="sum"):
    """Forward pass of FocalTverskyLoss (matches the PyTorch module semantics)."""
    st, s_sum, t_sum = _tversky_sums(inputs, targets)
    tp = st
    # fp/fn from global sums; clamp at 0 so f32 rounding can never push
    # tversky above 1 and produce NaN via (negative)**float_gamma.
    fp = jnp.maximum(s_sum - st, 0.0)    # == sum((1 - t) * s)
    fn = jnp.maximum(t_sum - st, 0.0)    # == sum(t * (1 - s))
    tversky = (tp + epsilon) / (tp + alpha * fp + beta * fn + epsilon)
    loss = jnp.maximum(1.0 - tversky, 0.0) ** gamma
    # 'mean' / 'sum' reductions over a 0-d scalar are both the identity.
    return loss


def _reference_loss(inputs, targets, alpha=1.0, beta=0.3, gamma=2.0,
                    epsilon=1e-6):
    s = jax.nn.sigmoid(inputs.reshape(-1).astype(jnp.float32))
    t = targets.reshape(-1).astype(jnp.float32)
    tp = jnp.sum(s * t)
    fp = jnp.sum((1.0 - t) * s)
    fn = jnp.sum(t * (1.0 - s))
    tversky = (tp + epsilon) / (tp + alpha * fp + beta * fn + epsilon)
    return (1.0 - tversky) ** gamma


if __name__ == "__main__":
    key = jax.random.PRNGKey(0)
    keys = jax.random.split(key, 10)

    def check(x, y):
        loss = jax.block_until_ready(focal_tversky_loss(x, y))
        ref = jax.block_until_ready(_reference_loss(x, y))
        assert jnp.allclose(loss, ref, rtol=1e-4, atol=1e-6), (loss, ref)

    # Primary small NCHW case (binary segmentation logits + binary targets).
    x = jax.random.normal(keys[0], (2, 4, 16, 16), dtype=jnp.float32)
    y = (jax.random.uniform(keys[1], (2, 4, 16, 16)) > 0.5).astype(jnp.float32)
    check(x, y)

    # Ragged element count (n % 128 != 0): exercises the sentinel pad and the
    # plain-JAX leftover rows.
    xr = jax.random.normal(keys[2], (3, 5, 7, 11), dtype=jnp.float32)
    yr = (jax.random.uniform(keys[3], (3, 5, 7, 11)) > 0.5).astype(jnp.float32)
    check(xr, yr)

    # Medium case: exercises the 2-way parallel leading axis (grid (2, 1)).
    xb = jax.random.normal(keys[4], (2, 4, 192, 128), dtype=jnp.float32)
    yb = (jax.random.uniform(keys[5], (2, 4, 192, 128)) > 0.5).astype(jnp.float32)
    check(xb, yb)

    # Larger case with an uneven row count: exercises the VMEM accumulator
    # across several sequential grid steps, the strip-mined fori_loop, and the
    # plain-JAX leftover-rows path (no in-kernel masking anywhere).
    xc = jax.random.normal(keys[6], (1, 1, 9000, 128), dtype=jnp.float32)
    yc = (jax.random.uniform(keys[7], (1, 1, 9000, 128)) > 0.5).astype(jnp.float32)
    check(xc, yc)

    # bf16 logits: HBM traffic stays at bf16; widening to f32 happens in-kernel.
    xh = jax.random.normal(keys[8], (2, 4, 32, 128), dtype=jnp.bfloat16)
    yh = (jax.random.uniform(keys[9], (2, 4, 32, 128)) > 0.5).astype(jnp.float32)
    check(xh, yh)

    print("KERNEL_OK")
</pallas_src>

<mosaic_0001>
module attributes {stable_mosaic.version = 11 : i64} {
  func.func @_ftl_partials_kernel(%arg0: i32, %arg1: i32, %arg2: memref<16x128xf32, #tpu.memory_space<vmem>>, %arg3: memref<16x128xf32, #tpu.memory_space<vmem>>, %arg4: memref<3x8x128xf32, #tpu.memory_space<vmem>>) attributes {dimension_semantics = [#tpu.dimension_semantics<parallel>, #tpu.dimension_semantics<arbitrary>], iteration_bounds = array<i64: 1, 1>, scalar_prefetch = 0 : i64, scratch_operands = 0 : i64, tpu.core_type = #tpu.core_type<tc>, window_params = [{transform_indices = @transform_0, window_bounds = array<i64: 16, 128>}, {transform_indices = @transform_1, window_bounds = array<i64: 16, 128>}, {transform_indices = @transform_2, window_bounds = array<i64: 3, 8, 128>}]} {
    %c0_i32 = arith.constant 0 : i32
    %0 = arith.cmpi eq, %arg1, %c0_i32 : i32
    %1 = arith.extui %0 : i1 to i32
    %c0_i32_0 = arith.constant 0 : i32
    %2 = arith.cmpi ne, %1, %c0_i32_0 : i32
    scf.if %2 {
      %cst_24 = arith.constant 0.000000e+00 : f32
      %39 = vector.broadcast %cst_24 : f32 to vector<3x8x128xf32>
      %c0_25 = arith.constant 0 : index
      %c0_26 = arith.constant 0 : index
      %c0_27 = arith.constant 0 : index
      %40 = vector.load %arg4[%c0_25, %c0_26, %c0_27] : memref<3x8x128xf32, #tpu.memory_space<vmem>>, vector<3x8x128xf32>
      tpu.vector_store %arg4[%c0_25, %c0_26, %c0_27], %39 {strides = array<i32>} : memref<3x8x128xf32, #tpu.memory_space<vmem>>, vector<3x8x128xf32>,
    } else {
    }
    %cst = arith.constant 0.000000e+00 : f32
    %3 = vector.broadcast %cst : f32 to vector<8x128xf32>
    %c0 = arith.constant 0 : index
    %c0_1 = arith.constant 0 : index
    %4 = vector.load %arg2[%c0, %c0_1] : memref<16x128xf32, #tpu.memory_space<vmem>>, vector<16x128xf32>
    %c0_2 = arith.constant 0 : index
    %c0_3 = arith.constant 0 : index
    %5 = vector.load %arg3[%c0_2, %c0_3] : memref<16x128xf32, #tpu.memory_space<vmem>>, vector<16x128xf32>
    %6 = arith.negf %4 : vector<16x128xf32>
    %7 = math.exp %6 : vector<16x128xf32>
    %cst_4 = arith.constant 1.000000e+00 : f32
    %8 = vector.broadcast %cst_4 : f32 to vector<16x128xf32>
    %9 = arith.addf %8, %7 : vector<16x128xf32>
    %10 = arith.divf %8, %9 : vector<16x128xf32>
    %11 = arith.mulf %10, %5 : vector<16x128xf32>
    %12 = vector.shape_cast %11 : vector<16x128xf32> to vector<2x8x128xf32>
    %cst_5 = arith.constant dense<0.000000e+00> : vector<8x128xf32>
    %13 = vector.multi_reduction <add>, %12, %cst_5 [0] : vector<2x8x128xf32> to vector<8x128xf32>
    %14 = vector.shape_cast %10 : vector<16x128xf32> to vector<2x8x128xf32>
    %cst_6 = arith.constant dense<0.000000e+00> : vector<8x128xf32>
    %15 = vector.multi_reduction <add>, %14, %cst_6 [0] : vector<2x8x128xf32> to vector<8x128xf32>
    %16 = vector.shape_cast %5 : vector<16x128xf32> to vector<2x8x128xf32>
    %cst_7 = arith.constant dense<0.000000e+00> : vector<8x128xf32>
    %17 = vector.multi_reduction <add>, %16, %cst_7 [0] : vector<2x8x128xf32> to vector<8x128xf32>
    %18 = arith.addf %3, %13 : vector<8x128xf32>
    %19 = arith.addf %3, %15 : vector<8x128xf32>
    %20 = arith.addf %3, %17 : vector<8x128xf32>
    %c0_8 = arith.constant 0 : index
    %c0_9 = arith.constant 0 : index
    %c0_10 = arith.constant 0 : index
    %21 = vector.load %arg4[%c0_8, %c0_9, %c0_10] : memref<3x8x128xf32, #tpu.memory_space<vmem>>, vector<1x8x128xf32>
    %22 = vector.shape_cast %21 : vector<1x8x128xf32> to vector<8x128xf32>
    %23 = arith.addf %22, %18 : vector<8x128xf32>
    %c0_11 = arith.constant 0 : index
    %c0_12 = arith.constant 0 : index
    %c0_13 = arith.constant 0 : index
    %24 = vector.load %arg4[%c0_11, %c0_12, %c0_13] : memref<3x8x128xf32, #tpu.memory_space<vmem>>, vector<1x8x128xf32>
    %25 = vector.shape_cast %24 : vector<1x8x128xf32> to vector<8x128xf32>
    %26 = vector.shape_cast %23 : vector<8x128xf32> to vector<1x8x128xf32>
    tpu.vector_store %arg4[%c0_11, %c0_12, %c0_13], %26 {strides = array<i32>} : memref<3x8x128xf32, #tpu.memory_space<vmem>>, vector<1x8x128xf32>,
    %c1 = arith.constant 1 : index
    %c0_14 = arith.constant 0 : index
    %c0_15 = arith.constant 0 : index
    %27 = vector.load %arg4[%c1, %c0_14, %c0_15] : memref<3x8x128xf32, #tpu.memory_space<vmem>>, vector<1x8x128xf32>
    %28 = vector.shape_cast %27 : vector<1x8x128xf32> to vector<8x128xf32>
    %29 = arith.addf %28, %19 : vector<8x128xf32>
    %c1_16 = arith.constant 1 : index
    %c0_17 = arith.constant 0 : index
    %c0_18 = arith.constant 0 : index
    %30 = vector.load %arg4[%c1_16, %c0_17, %c0_18] : memref<3x8x128xf32, #tpu.memory_space<vmem>>, vector<1x8x128xf32>
    %31 = vector.shape_cast %30 : vector<1x8x128xf32> to vector<8x128xf32>
    %32 = vector.shape_cast %29 : vector<8x128xf32> to vector<1x8x128xf32>
    tpu.vector_store %arg4[%c1_16, %c0_17, %c0_18], %32 {strides = array<i32>} : memref<3x8x128xf32, #tpu.memory_space<vmem>>, vector<1x8x128xf32>,
    %c2 = arith.constant 2 : index
    %c0_19 = arith.constant 0 : index
    %c0_20 = arith.constant 0 : index
    %33 = vector.load %arg4[%c2, %c0_19, %c0_20] : memref<3x8x128xf32, #tpu.memory_space<vmem>>, vector<1x8x128xf32>
    %34 = vector.shape_cast %33 : vector<1x8x128xf32> to vector<8x128xf32>
    %35 = arith.addf %34, %20 : vector<8x128xf32>
    %c2_21 = arith.constant 2 : index
    %c0_22 = arith.constant 0 : index
    %c0_23 = arith.constant 0 : index
    %36 = vector.load %arg4[%c2_21, %c0_22, %c0_23] : memref<3x8x128xf32, #tpu.memory_space<vmem>>, vector<1x8x128xf32>
    %37 = vector.shape_cast %36 : vector<1x8x128xf32> to vector<8x128xf32>
    %38 = vector.shape_cast %35 : vector<8x128xf32> to vector<1x8x128xf32>
    tpu.vector_store %arg4[%c2_21, %c0_22, %c0_23], %38 {strides = array<i32>} : memref<3x8x128xf32, #tpu.memory_space<vmem>>, vector<1x8x128xf32>,
    return
  }
  func.func @transform_0(%arg0: i32, %arg1: i32) -> (i32, i32) {
    %c1_i32 = arith.constant 1 : i32
    %0 = arith.muli %arg0, %c1_i32 : i32
    %1 = arith.addi %0, %arg1 : i32
    %c0_i32 = arith.constant 0 : i32
    %c0_i32_0 = arith.constant 0 : i32
    return %1, %c0_i32 : i32, i32
  }
  func.func @transform_1(%arg0: i32, %arg1: i32) -> (i32, i32) {
    %c1_i32 = arith.constant 1 : i32
    %0 = arith.muli %arg0, %c1_i32 : i32
    %1 = arith.addi %0, %arg1 : i32
    %c0_i32 = arith.constant 0 : i32
    %c0_i32_0 = arith.constant 0 : i32
    return %1, %c0_i32 : i32, i32
  }
  func.func @transform_2(%arg0: i32, %arg1: i32) -> (i32, i32, i32) {
    %c0_i32 = arith.constant 0 : i32
    %c0_i32_0 = arith.constant 0 : i32
    %c0_i32_1 = arith.constant 0 : i32
    return %arg0, %c0_i32, %c0_i32_0 : i32, i32, i32
  }
}

</mosaic_0001>

<llo_original>
// kernel: tpu_custom_call.1
$region0: #{tpu_custom_call.1}
  #allocation0 [shape = 'u32[]', space=smem, size = 0x4, offset = 0x4, fixed_abs, tag = 'smem constant byte address 0x4 - core index']
  #allocation1 [shape = 'u32[72,128]{1,0:T(1,128)}', space=vmem, size = 0x9000, scoped, tag = 'internal scratch']
  %s0 = inlined_call_operand.hbm [shape: f32[16,128], index: 0, kind: input, shape index: {}]
  %s1 = inlined_call_operand.hbm [shape: f32[16,128], index: 1, kind: input, shape index: {}]
  %s2 = inlined_call_operand.hbm [shape: f32[3,8,128], index: 2, kind: output, shape index: {}]
  %s3 = sld [smem:[#allocation0]]
  $region30: #{tpu_custom_call.1} parent=0
    _
  %s5 = ssub.s32 1, %s3
  %s6 = scalar_select 0, %s5, %s3
  $region1: #{tpu_custom_call.1} parent=0
    #allocation2 [shape = 'u8[8192]{0}', space=vmem, size = 0x2000, scoped, tag = 'input window, operand 0, single buffered']
    #allocation3 [shape = 's32[1]{0}', space=sflag, size = 0x4, scoped, tag = 'scoped memory for tpu_custom_call.1']
    #allocation4 [shape = 's32[1]{0}', space=sflag, size = 0x4, scoped, tag = 'scoped memory for tpu_custom_call.1']
    #allocation5 [shape = 'u8[8192]{0}', space=vmem, size = 0x2000, scoped, tag = 'input window, operand 1, single buffered']
    #allocation6 [shape = 's32[1]{0}', space=sflag, size = 0x4, scoped, tag = 'scoped memory for tpu_custom_call.1']
    #allocation7 [shape = 'u8[12288]{0}', space=vmem, size = 0x3000, scoped, tag = 'output window, operand 0, single buffered']
    %7 = vsyncpa [#allocation3], 0
    %8 = vsyncpa [#allocation6], 0
    %9 = vsyncpa [#allocation4], 0
    // Predicated region
    $region2: #{tpu_custom_call.1} parent=1 // pred_check
      _
    $region3: #{tpu_custom_call.1} parent=1 // pred_check_branch
      %11 = sbr.rel (0) target = $region5
    $region4: #{tpu_custom_call.1} parent=1 // pred_region
      %s12 = sadd.s32 0, 0
      %s13 = smul.u32 2, %s12
      %15 = vsyncadd [#allocation3], 0
      %s16 = smul.addr %s13, 8
      %s17 = scalar_lea.hbm %s0, %s16
      %s18 = sshll.u32 %s17, 4
      %s19 = int_to_ptr.hbm [resolvable:$true] %s18
      %s20 = sshll.u32 [#allocation2], 4
      %s21 = int_to_ptr.vmem [resolvable:$true] %s20
      %26 = dma.hbm_to_vmem [thread:$0]  %s19, 256, %s21, [#allocation3], 128, 128, 8
    $region5: #{tpu_custom_call.1} parent=1 // pred_fallthru
      _
    // Predicated region
    $region6: #{tpu_custom_call.1} parent=1 // pred_check
      _
    $region7: #{tpu_custom_call.1} parent=1 // pred_check_branch
      %28 = sbr.rel (0) target = $region9
    $region8: #{tpu_custom_call.1} parent=1 // pred_region
      %s29 = sadd.s32 0, 0
      %s30 = smul.u32 2, %s29
      %32 = vsyncadd [#allocation6], 0
      %s33 = smul.addr %s30, 8
      %s34 = scalar_lea.hbm %s1, %s33
      %s35 = sshll.u32 %s34, 4
      %s36 = int_to_ptr.hbm [resolvable:$true] %s35
      %s37 = sshll.u32 [#allocation5], 4
      %s38 = int_to_ptr.vmem [resolvable:$true] %s37
      %43 = dma.hbm_to_vmem [thread:$0]  %s36, 256, %s38, [#allocation6], 128, 128, 8
    $region9: #{tpu_custom_call.1} parent=1 // pred_fallthru
      _
    // Predicated region
    $region10: #{tpu_custom_call.1} parent=1 // pred_check
      _
    $region11: #{tpu_custom_call.1} parent=1 // pred_check_branch
      %45 = sbr.rel (0) target = $region13
    $region12: #{tpu_custom_call.1} parent=1 // pred_region
      %47 = dma.done [#allocation3], 256
    $region13: #{tpu_custom_call.1} parent=1 // pred_fallthru
      _
    // Predicated region
    $region14: #{tpu_custom_call.1} parent=1 // pred_check
      _
    $region15: #{tpu_custom_call.1} parent=1 // pred_check_branch
      %49 = sbr.rel (0) target = $region17
    $region16: #{tpu_custom_call.1} parent=1 // pred_region
      %51 = dma.done [#allocation6], 256
    $region17: #{tpu_custom_call.1} parent=1 // pred_fallthru
      _
    %s52 = sadd.s32 0, 0
    %s53 = smul.u32 2, %s52
    %s54 = sadd.s32 0, 0
    %s55 = smul.u32 2, %s54
    %p56 = scmp.eq.s32.totalorder 0, 0
    // Predicated region
    $region18: #{tpu_custom_call.1} parent=1 // pred_check
      %p57 = pneg %p56
    $region19: #{tpu_custom_call.1} parent=1 // pred_check_branch
      %59 = sbr.rel (%p57) target = $region21
    $region20: #{tpu_custom_call.1} parent=1 // pred_region
      %60 = vst [vmem:[#allocation7] sm:$0xff] 0.0
      %61 = vst [vmem:[#allocation7 + $0x8] sm:$0xff] 0.0
      %62 = vst [vmem:[#allocation7 + $0x10] sm:$0xff] 0.0
    $region21: #{tpu_custom_call.1} parent=1 // pred_fallthru
      _
    %v63 = vld [vmem:[#allocation2] sm:$0xff]
    %v64 = vld [vmem:[#allocation2 + $0x8] sm:$0xff]
    %v65 = vld [vmem:[#allocation5] sm:$0xff]
    %v66 = vld [vmem:[#allocation5 + $0x8] sm:$0xff]
    %v67 = vxor.u32 %v63, 2147483648
    %v68 = vxor.u32 %v64, 2147483648
    %v69 = vmul.f32 %v67, 1.442695
    %v70 = vpow.pop %v69
    %v71 = vmul.f32 %v68, 1.442695
    %v72 = vpow.pop %v71
    %v73 = vadd.f32 %v70, 1.0
    %v74 = vadd.f32 %v72, 1.0
    %v75 = vrcp.pop %v73
    %v76 = vmul.f32 %v73, %v75
    %v77 = vsub.f32 1.0, %v76
    %v78 = vmul.f32 %v75, %v77
    %v79 = vadd.f32 %v75, %v78
    %vm80 = vweird.f32 %v73
    %vm81 = vweird.f32 %v75
    %vm82 = vmor %vm80, %vm81
    %v83 = vsel %vm82, %v75, %v79
    %v84 = vand.u32 2147483647, %v73
    %vm85 = vcmp.eq.f32.partialorder %v84, 8.507059e+37
    %v86 = vand.u32 %v73, 2147483648
    %v87 = vor.u32 1.1754944e-38, %v86
    %v88 = vsel %vm85, %v87, %v83
    %v89 = vmul.f32 1.0, %v88
    %v90 = vrcp.pop %v74
    %v91 = vmul.f32 %v74, %v90
    %v92 = vsub.f32 1.0, %v91
    %v93 = vmul.f32 %v90, %v92
    %v94 = vadd.f32 %v90, %v93
    %vm95 = vweird.f32 %v74
    %vm96 = vweird.f32 %v90
    %vm97 = vmor %vm95, %vm96
    %v98 = vsel %vm97, %v90, %v94
    %v99 = vand.u32 2147483647, %v74
    %vm100 = vcmp.eq.f32.partialorder %v99, 8.507059e+37
    %v101 = vand.u32 %v74, 2147483648
    %v102 = vor.u32 1.1754944e-38, %v101
    %v103 = vsel %vm100, %v102, %v98
    %v104 = vmul.f32 1.0, %v103
    %v105 = vmul.f32 %v89, %v65
    %v106 = vmul.f32 %v104, %v66
    %v107 = vadd.f32 %v105, %v106
    %v108 = vadd.f32 %v89, %v104
    %v109 = vadd.f32 %v65, %v66
    %v110 = vadd.f32 %v107, 0.0
    %v111 = vadd.f32 %v108, 0.0
    %v112 = vadd.f32 %v109, 0.0
    %v113 = vld [vmem:[#allocation7] sm:$0xff]
    %v114 = vadd.f32 %v113, %v110
    %115 = vst [vmem:[#allocation7] sm:$0xff] %v114
    %s116 = scalar_lea.vmem [#allocation7], 8
    %v117 = vld [vmem:[%s116] sm:$0xff]
    %v118 = vadd.f32 %v117, %v111
    %119 = vst [vmem:[%s116] sm:$0xff] %v118
    %s120 = scalar_lea.vmem [#allocation7], 16
    %v121 = vld [vmem:[%s120] sm:$0xff]
    %v122 = vadd.f32 %v121, %v112
    %123 = vst [vmem:[%s120] sm:$0xff] %v122
    // Predicated region
    $region22: #{tpu_custom_call.1} parent=1 // pred_check
      _
    $region23: #{tpu_custom_call.1} parent=1 // pred_check_branch
      %125 = sbr.rel (0) target = $region25
    $region24: #{tpu_custom_call.1} parent=1 // pred_region
      %127 = vsyncadd [#allocation4], 0
      %s128 = sshll.u32 [#allocation7], 4
      %s129 = int_to_ptr.vmem [resolvable:$true] %s128
      %s130 = sshll.u32 %s2, 4
      %s131 = int_to_ptr.hbm [resolvable:$true] %s130
      %136 = dma.vmem_to_hbm [thread:$0]  %s129, 384, %s131, [#allocation4], 128, 128, 8
    $region25: #{tpu_custom_call.1} parent=1 // pred_fallthru
      _
    // Predicated region
    $region26: #{tpu_custom_call.1} parent=1 // pred_check
      _
    $region27: #{tpu_custom_call.1} parent=1 // pred_check_branch
      %138 = sbr.rel (0) target = $region29
    $region28: #{tpu_custom_call.1} parent=1 // pred_region
      %140 = dma.done [#allocation4], 384
    $region29: #{tpu_custom_call.1} parent=1 // pred_fallthru
      _
    %141 = vsyncpa [#allocation3], 1
    %142 = vsyncpa [#allocation6], 1
    %143 = vsyncpa [#allocation4], 1

</llo_original>
